<compile_context>
chip_gen: v7x
topology: tpu7x:2x2x1
jax: 0.10.0
libtpu: 0.0.40
codegen_flags: <defaults>
</compile_context>

<pallas_src>
import functools

import jax
import jax.numpy as jnp
from jax.experimental import pallas as pl
from jax.experimental.pallas import tpu as pltpu


def make_positional_table(num_hiddens: int, max_len: int = 1000) -> jnp.ndarray:
    """Build P of shape (1, max_len, num_hiddens) exactly like the torch init.

    Note: the reference module uses base 1000 (not the textbook 10000); we
    mirror the spec.
    """
    pos = jnp.arange(max_len, dtype=jnp.float32).reshape(-1, 1)
    div = jnp.power(
        1000.0,
        jnp.arange(0, num_hiddens, 2, dtype=jnp.float32) / num_hiddens,
    )
    X = pos / div  # (max_len, num_hiddens // 2)
    P = jnp.zeros((max_len, num_hiddens), dtype=jnp.float32)
    P = P.at[:, 0::2].set(jnp.sin(X))
    P = P.at[:, 1::2].set(jnp.cos(X))
    return P[None, :, :]  # (1, max_len, num_hiddens)


# ----------------------------------------------------------------------------
# Kernels
# ----------------------------------------------------------------------------
def _pe_eval_kernel(x_ref, p_ref, o_ref):
    # Eval mode: dropout is identity; p_ref block (1, Ct) broadcasts over rows.
    o_ref[...] = (x_ref[...] + p_ref[...]).astype(o_ref.dtype)


def _pe_train_kernel(x_ref, p_ref, bits_ref, o_ref, *, threshold: int, scale: float):
    # Train mode: add positional encoding, then inverted dropout via an
    # integer threshold on pre-generated uint32 random bits.
    y = x_ref[...] + p_ref[...]
    keep = bits_ref[...] < jnp.uint32(threshold)
    o_ref[...] = jnp.where(
        keep, y * jnp.float32(scale), jnp.zeros_like(y)
    ).astype(o_ref.dtype)


# ----------------------------------------------------------------------------
# Tiling / wrapper
# ----------------------------------------------------------------------------
def _pick_tiles(n_rows: int, n_cols: int, itemsize: int,
                target_bytes: int = 2 * 1024 * 1024):
    """Choose (row_tile, col_tile) for a lane-dense, VMEM-friendly blocking."""
    # Column (lane) tile: full width when it fits, else a big multiple of 128.
    if n_cols * itemsize <= target_bytes:
        ct = n_cols
    else:
        ct = max(128, ((target_bytes // itemsize) // 128) * 128)
    # Row (sublane) tile: as many rows as fit the per-tile byte budget.
    rows = max(1, target_bytes // max(ct * itemsize, 1))
    if rows >= n_rows:
        rt = n_rows
    else:
        rt = max(8, (rows // 8) * 8)
    return rt, ct


def positional_encoding(x, P, *, dropout: float = 0.0, training: bool = False,
                        key=None):
    """x: (B, S, H); P: (1, max_len, H).  Returns (B, S, H)."""
    B, S, H = x.shape
    C = S * H

    # Lane-dense 2-D views: rows = batch, cols = S*H (P broadcasts over rows).
    x2 = x.reshape(B, C)
    p2 = P[:, :S, :].reshape(1, C)

    rt, ct = _pick_tiles(B, C, jnp.dtype(x.dtype).itemsize)
    # Column tiles outer, row tiles inner -> P block index is constant across
    # the inner axis, so it stays resident in VMEM (fetched once per col tile).
    grid = (pl.cdiv(C, ct), pl.cdiv(B, rt))

    x_spec = pl.BlockSpec((rt, ct), lambda c, r: (r, c))
    p_spec = pl.BlockSpec((1, ct), lambda c, r: (0, c))
    o_spec = pl.BlockSpec((rt, ct), lambda c, r: (r, c))

    cparams = pltpu.CompilerParams(
        dimension_semantics=("parallel", "parallel"),
        vmem_limit_bytes=32 * 1024 * 1024,
    )

    if training and dropout > 0.0:
        if key is None:
            key = jax.random.PRNGKey(0)
        # TODO(synk): in-kernel pltpu.prng_random_bits would avoid this HBM
        # round trip, but the hardware PRNG primitives do not lower in
        # interpret mode, so the bits are generated with jax.random instead.
        bits = jax.random.bits(key, (B, C), dtype=jnp.uint32)
        keep_prob = 1.0 - float(dropout)
        threshold = min(int(keep_prob * (2.0 ** 32)), 2 ** 32 - 1)
        kernel = functools.partial(
            _pe_train_kernel, threshold=threshold, scale=1.0 / keep_prob)
        out2 = pl.pallas_call(
            kernel,
            grid=grid,
            in_specs=[x_spec, p_spec, x_spec],  # bits shares x's blocking
            out_specs=o_spec,
            out_shape=jax.ShapeDtypeStruct((B, C), x.dtype),
            compiler_params=cparams,
        )(x2, p2, bits)
    else:
        out2 = pl.pallas_call(
            _pe_eval_kernel,
            grid=grid,
            in_specs=[x_spec, p_spec],
            out_specs=o_spec,
            out_shape=jax.ShapeDtypeStruct((B, C), x.dtype),
            compiler_params=cparams,
        )(x2, p2)

    return out2.reshape(B, S, H)


# ----------------------------------------------------------------------------
# Demo / self-test
# ----------------------------------------------------------------------------
if __name__ == "__main__":
    # Small, forward-consistent shapes: batch=2, seq=8, hidden=32.
    B, S, H = 2, 8, 32
    dropout_rate = 0.1
    max_len = 1000

    root = jax.random.PRNGKey(0)
    kx, kd = jax.random.split(root)
    x = jax.random.normal(kx, (B, S, H), dtype=jnp.float32)

    # Deterministic "parameter" setup (mirrors the module __init__).
    P = make_positional_table(H, max_len=max_len)

    # Eval-mode forward (dropout identity) — matches module.eval() semantics.
    out = positional_encoding(x, P, dropout=dropout_rate, training=False)
    out = jax.block_until_ready(out)

    ref = x + P[:, :S, :]
    assert out.shape == (B, S, H)
    assert jnp.allclose(out, ref, atol=1e-6), "eval mismatch vs reference"

    # Train-mode forward (inverted dropout inside the kernel).
    # TODO(synk): PyTorch's dropout RNG stream cannot be reproduced bit-exactly;
    # the mask comes from jax.random bits with the same keep-prob/scale.
    out_train = positional_encoding(
        x, P, dropout=dropout_rate, training=True, key=kd)
    out_train = jax.block_until_ready(out_train)
    assert out_train.shape == (B, S, H)
    scaled = ref / (1.0 - dropout_rate)
    ok = jnp.isclose(out_train, 0.0, atol=1e-6) | jnp.isclose(
        out_train, scaled, atol=1e-5)
    assert bool(jnp.all(ok)), "train values must be 0 or (x+P)/(1-p)"

    print("KERNEL_OK")
</pallas_src>

<mosaic_0001>
module attributes {stable_mosaic.version = 11 : i64} {
  func.func @_pe_eval_kernel(%arg0: i32, %arg1: i32, %arg2: memref<2x256xf32, #tpu.memory_space<vmem>>, %arg3: memref<1x256xf32, #tpu.memory_space<vmem>>, %arg4: memref<2x256xf32, #tpu.memory_space<vmem>>) attributes {dimension_semantics = [#tpu.dimension_semantics<parallel>, #tpu.dimension_semantics<parallel>], iteration_bounds = array<i64: 1, 1>, scalar_prefetch = 0 : i64, scratch_operands = 0 : i64, tpu.core_type = #tpu.core_type<tc>, window_params = [{transform_indices = @transform_0, window_bounds = array<i64: 2, 256>}, {transform_indices = @transform_1, window_bounds = array<i64: 1, 256>}, {transform_indices = @transform_2, window_bounds = array<i64: 2, 256>}]} {
    %c0 = arith.constant 0 : index
    %c0_0 = arith.constant 0 : index
    %0 = vector.load %arg2[%c0, %c0_0] : memref<2x256xf32, #tpu.memory_space<vmem>>, vector<2x256xf32>
    %c0_1 = arith.constant 0 : index
    %c0_2 = arith.constant 0 : index
    %1 = vector.load %arg3[%c0_1, %c0_2] : memref<1x256xf32, #tpu.memory_space<vmem>>, vector<1x256xf32>
    %2 = vector.broadcast %1 : vector<1x256xf32> to vector<2x256xf32>
    %3 = arith.addf %0, %2 : vector<2x256xf32>
    %c0_3 = arith.constant 0 : index
    %c0_4 = arith.constant 0 : index
    %4 = vector.load %arg4[%c0_3, %c0_4] : memref<2x256xf32, #tpu.memory_space<vmem>>, vector<2x256xf32>
    tpu.vector_store %arg4[%c0_3, %c0_4], %3 {strides = array<i32>} : memref<2x256xf32, #tpu.memory_space<vmem>>, vector<2x256xf32>,
    return
  }
  func.func @transform_0(%arg0: i32, %arg1: i32) -> (i32, i32) {
    %c0_i32 = arith.constant 0 : i32
    return %arg1, %arg0 : i32, i32
  }
  func.func @transform_1(%arg0: i32, %arg1: i32) -> (i32, i32) {
    %c0_i32 = arith.constant 0 : i32
    %c0_i32_0 = arith.constant 0 : i32
    return %c0_i32, %arg0 : i32, i32
  }
  func.func @transform_2(%arg0: i32, %arg1: i32) -> (i32, i32) {
    %c0_i32 = arith.constant 0 : i32
    return %arg1, %arg0 : i32, i32
  }
}

</mosaic_0001>

<llo_original>
// kernel: tpu_custom_call.1
$region0: #{tpu_custom_call.1}
  #allocation0 [shape = 'u32[]', space=smem, size = 0x4, offset = 0x4, fixed_abs, tag = 'smem constant byte address 0x4 - core index']
  #allocation1 [shape = 'u32[144,128]{1,0:T(1,128)}', space=vmem, size = 0x12000, scoped, tag = 'internal scratch']
  %s0 = inlined_call_operand.hbm [shape: f32[2,256], index: 0, kind: input, shape index: {}]
  %s1 = inlined_call_operand.vmem [shape: f32[1,256], index: 1, kind: input, shape index: {}]
  %s2 = inlined_call_operand.hbm [shape: f32[2,256], index: 2, kind: output, shape index: {}]
  %s3 = sld [smem:[#allocation0]]
  $region22: #{tpu_custom_call.1} parent=0
    _
  %s5 = ssub.s32 1, %s3
  %s6 = scalar_select 0, %s5, %s3
  $region1: #{tpu_custom_call.1} parent=0
    #allocation2 [shape = 'u8[2048]{0}', space=vmem, size = 0x800, scoped, tag = 'input window, operand 0, single buffered']
    #allocation3 [shape = 's32[1]{0}', space=sflag, size = 0x4, scoped, tag = 'scoped memory for tpu_custom_call.1']
    #allocation4 [shape = 's32[1]{0}', space=sflag, size = 0x4, scoped, tag = 'scoped memory for tpu_custom_call.1']
    #allocation5 [shape = 'u8[2048]{0}', space=vmem, size = 0x800, scoped, tag = 'output window, operand 0, single buffered']
    %7 = vsyncpa [#allocation3], 0
    %8 = vsyncpa [#allocation4], 0
    // Predicated region
    $region2: #{tpu_custom_call.1} parent=1 // pred_check
      _
    $region3: #{tpu_custom_call.1} parent=1 // pred_check_branch
      %10 = sbr.rel (0) target = $region5
    $region4: #{tpu_custom_call.1} parent=1 // pred_region
      %s12 = ssub.s32 64, 64
      %13 = vsyncadd [#allocation3], %s12
      %s15 = sshll.u32 [#allocation2], 4
      %s16 = int_to_ptr.vmem [resolvable:$true] %s15
      %18 = dma.hbm_to_vmem [thread:$0]  %s0, 64, %s16, [#allocation3]
    $region5: #{tpu_custom_call.1} parent=1 // pred_fallthru
      _
    // Predicated region
    $region6: #{tpu_custom_call.1} parent=1 // pred_check
      _
    $region7: #{tpu_custom_call.1} parent=1 // pred_check_branch
      %20 = sbr.rel (0) target = $region9
    $region8: #{tpu_custom_call.1} parent=1 // pred_region
      _
    $region9: #{tpu_custom_call.1} parent=1 // pred_fallthru
      _
    // Predicated region
    $region10: #{tpu_custom_call.1} parent=1 // pred_check
      _
    $region11: #{tpu_custom_call.1} parent=1 // pred_check_branch
      %22 = sbr.rel (0) target = $region13
    $region12: #{tpu_custom_call.1} parent=1 // pred_region
      %23 = dma.done [#allocation3], 64
    $region13: #{tpu_custom_call.1} parent=1 // pred_fallthru
      _
    %v24 = vld [vmem:[#allocation2] sm:$0xf]
    %v25 = vld [vmem:[%s1] sm:$0x3]
    %v27 = vlaneseq
    %v28 = vshrl.u32 %v27, 7
    %v29 = vsub.s32 0, %v28
    %v30 = vrot.slane %v25, %v29
    %v31 = vlaneseq
    %v32 = vshrl.u32 %v31, 7
    %v33 = vsub.s32 1, %v32
    %v34 = vrot.slane %v25, %v33
    %v35 = vcombine.low %v30, %v34
    %v37 = vunpack.c.l.s4 1983009808
    %v38 = vunpack.c.0.s8 %v37
    %v39 = vlaneseq
    %v40 = vshrl.u32 %v39, 7
    %v41 = vsub.s32 %v38, %v40
    %v42 = vrot.slane %v35, %v41
    %v44 = vadd.f32 %v24, %v42
    %45 = vst [vmem:[#allocation5] sm:$0xf] %v44
    // Predicated region
    $region14: #{tpu_custom_call.1} parent=1 // pred_check
      _
    $region15: #{tpu_custom_call.1} parent=1 // pred_check_branch
      %47 = sbr.rel (0) target = $region17
    $region16: #{tpu_custom_call.1} parent=1 // pred_region
      %s49 = ssub.s32 64, 64
      %50 = vsyncadd [#allocation4], %s49
      %s52 = sshll.u32 [#allocation5], 4
      %s53 = int_to_ptr.vmem [resolvable:$true] %s52
      %55 = dma.vmem_to_hbm [thread:$0]  %s53, 64, %s2, [#allocation4]
    $region17: #{tpu_custom_call.1} parent=1 // pred_fallthru
      _
    // Predicated region
    $region18: #{tpu_custom_call.1} parent=1 // pred_check
      _
    $region19: #{tpu_custom_call.1} parent=1 // pred_check_branch
      %57 = sbr.rel (0) target = $region21
    $region20: #{tpu_custom_call.1} parent=1 // pred_region
      %58 = dma.done [#allocation4], 64
    $region21: #{tpu_custom_call.1} parent=1 // pred_fallthru
      _
    %59 = vsyncpa [#allocation3], 1
    %60 = vsyncpa [#allocation4], 1

</llo_original>
